<compile_context>
chip_gen: v5e
topology: v5e:2x2
jax: 0.10.0
libtpu: 0.0.40
codegen_flags: <defaults>
</compile_context>

<pallas_src>
import jax
import jax.numpy as jnp
from jax.experimental import pallas as pl
from jax.experimental.pallas import tpu as pltpu


def _make_kernel(tile_n, inv_mn, scaled_inv_kn, fold_lanes):
    n_fold = tile_n // 128 if fold_lanes else 0

    def kernel(op_ref, x_ref, t_ref, out_ref, acc_d_ref, acc_dd_ref):
        j = pl.program_id(1)

        @pl.when(j == 0)
        def _init():
            acc_d_ref[...] = jnp.zeros_like(acc_d_ref)
            acc_dd_ref[...] = jnp.zeros_like(acc_dd_ref)

        x = x_ref[...].astype(jnp.float32)
        t = t_ref[...].astype(jnp.float32)
        d = x - t
        dsq = d * d

        # Single matmul: op @ (x - t) on the MXU (bf16 inputs, f32 accumulate).
        w = op_ref[...].astype(jnp.bfloat16)
        dd = jnp.dot(w, d.astype(jnp.bfloat16),
                     preferred_element_type=jnp.float32)
        ddsq = dd * dd

        if fold_lanes:
            # Defer the cross-lane/sublane reduction: fold 128-lane columns
            # into resident accumulators with pure VPU adds (static,
            # 128-aligned value slices are free).
            for c in range(n_fold):
                sl = slice(c * 128, (c + 1) * 128)
                acc_d_ref[...] += dsq[:, sl]
                acc_dd_ref[...] += ddsq[:, sl]
        else:
            acc_d_ref[...] += jnp.sum(dsq, keepdims=True)
            acc_dd_ref[...] += jnp.sum(ddsq, keepdims=True)

        @pl.when(j == pl.num_programs(1) - 1)
        def _finalize():
            s_d = jnp.sum(acc_d_ref[...], keepdims=True)    # (1, 1)
            s_dd = jnp.sum(acc_dd_ref[...], keepdims=True)  # (1, 1)
            out_ref[...] = s_d * inv_mn + s_dd * scaled_inv_kn

    return kernel


def mse_plus_op_loss(op, x, t, *, max_tile_n=2048,
                     vmem_budget_bytes=32 * 1024 * 1024):
    """op: [K, M], x/t: [M, N] -> scalar float32 loss (MSE + 1e-7 * op-MSE)."""
    K, M = op.shape
    M2, N = x.shape
    assert M == M2 and x.shape == t.shape

    itemsize = max(x.dtype.itemsize, t.dtype.itemsize)
    op_bytes = K * M * op.dtype.itemsize

    # --- pick the lane tile TN ---------------------------------------------
    # VMEM budget: x and t tiles, double-buffered by the BlockSpec pipeline:
    #   2 inputs * 2 buffers * M * TN * itemsize  (+ the resident op block).
    tile_budget = max(vmem_budget_bytes - 2 * op_bytes, 4 * 128 * M * itemsize)
    max_tn = max(128, (tile_budget // (4 * M * itemsize)) // 128 * 128)
    if N % 128 == 0:
        tn = min(max_tile_n, max_tn, N)
        tn = max(128, (tn // 128) * 128)
        while N % tn != 0:        # keep tiles lane-dense and unmasked
            tn -= 128
    else:
        tn = N                    # ragged lane dim: single tile along N
    n_tiles = N // tn
    # TODO(synk): for very large M also tile the contraction axis M with a
    # third "arbitrary" grid axis and an f32 matmul accumulator.

    # Outer "parallel" axis so v7x's two TensorCores split the lane tiles;
    # each emits a scaled partial sum, combined in the wrapper.
    n_outer = 2 if (n_tiles % 2 == 0 and n_tiles >= 2) else 1
    n_inner = n_tiles // n_outer

    fold_lanes = (tn % 128 == 0)
    acc_d_shape = (M, 128) if fold_lanes else (1, 1)
    acc_dd_shape = (K, 128) if fold_lanes else (1, 1)

    inv_mn = 1.0 / float(M * N)
    scaled_inv_kn = 1e-07 / float(K * N)

    kernel = _make_kernel(tn, inv_mn, scaled_inv_kn, fold_lanes)

    grid_spec = pltpu.PrefetchScalarGridSpec(
        num_scalar_prefetch=0,
        grid=(n_outer, n_inner),
        in_specs=[
            pl.BlockSpec((K, M), lambda i, j: (0, 0)),              # op (resident)
            pl.BlockSpec((M, tn), lambda i, j: (0, i * n_inner + j)),  # x
            pl.BlockSpec((M, tn), lambda i, j: (0, i * n_inner + j)),  # t
        ],
        out_specs=pl.BlockSpec((None, 1, 1), lambda i, j: (i, 0, 0)),
        scratch_shapes=[
            pltpu.VMEM(acc_d_shape, jnp.float32),
            pltpu.VMEM(acc_dd_shape, jnp.float32),
        ],
    )

    cost = pl.CostEstimate(
        flops=2 * K * M * N + 4 * M * N + 2 * K * N,
        transcendentals=0,
        bytes_accessed=(2 * M * N + K * M) * itemsize + n_outer * 4,
    )

    partials = pl.pallas_call(
        kernel,
        out_shape=jax.ShapeDtypeStruct((n_outer, 1, 1), jnp.float32),
        grid_spec=grid_spec,
        compiler_params=pltpu.CompilerParams(
            dimension_semantics=("parallel", "arbitrary"),
            vmem_limit_bytes=48 * 1024 * 1024,
        ),
        cost_estimate=cost,
    )(op, x, t)
    return jnp.sum(partials)


if __name__ == "__main__":
    key = jax.random.PRNGKey(0)
    k_op, k_x, k_t = jax.random.split(key, 3)

    K, M, N = 16, 32, 512
    op = jax.random.normal(k_op, (K, M), dtype=jnp.float32)   # fixed operator
    x = jax.random.normal(k_x, (M, N), dtype=jnp.float32)     # input
    t = jax.random.normal(k_t, (M, N), dtype=jnp.float32)     # target

    # Pure-JAX reference of the PyTorch forward semantics.
    ref = jnp.mean((x - t) ** 2) + jnp.mean((op @ x - op @ t) ** 2) * 1e-07

    # Default tiling (single lane tile at this small size).
    loss = jax.block_until_ready(mse_plus_op_loss(op, x, t))
    assert jnp.allclose(loss, ref, rtol=1e-5, atol=1e-6), (loss, ref)

    # Force a small lane tile so the pipelined/accumulating path
    # (grid=(2, 2): init / accumulate / finalize + two partial sums) runs too.
    loss_tiled = jax.block_until_ready(
        mse_plus_op_loss(op, x, t, max_tile_n=128))
    assert jnp.allclose(loss_tiled, ref, rtol=1e-5, atol=1e-6), (loss_tiled, ref)

    print("KERNEL_OK")
</pallas_src>

<mosaic_0001>
module attributes {stable_mosaic.version = 11 : i64} {
  func.func @kernel(%arg0: i32, %arg1: i32, %arg2: memref<16x32xf32, #tpu.memory_space<vmem>>, %arg3: memref<32x512xf32, #tpu.memory_space<vmem>>, %arg4: memref<32x512xf32, #tpu.memory_space<vmem>>, %arg5: memref<1x1x1xf32, #tpu.memory_space<vmem>>, %arg6: memref<32x128xf32, #tpu.memory_space<vmem>>, %arg7: memref<16x128xf32, #tpu.memory_space<vmem>>) attributes {dimension_semantics = [#tpu.dimension_semantics<parallel>, #tpu.dimension_semantics<arbitrary>], iteration_bounds = array<i64: 1, 1>, scalar_prefetch = 0 : i64, scratch_operands = 2 : i64, tpu.core_type = #tpu.core_type<tc>, window_params = [{pipeline_mode = #tpu.pipeline_mode<synchronous>, transform_indices = @transform_0, window_bounds = array<i64: 16, 32>}, {transform_indices = @transform_1, window_bounds = array<i64: 32, 512>}, {transform_indices = @transform_2, window_bounds = array<i64: 32, 512>}, {transform_indices = @transform_3, window_bounds = array<i64: 1, 1, 1>}]} {
    %c0_i32 = arith.constant 0 : i32
    %0 = arith.cmpi eq, %arg1, %c0_i32 : i32
    %1 = arith.extui %0 : i1 to i32
    %c0_i32_0 = arith.constant 0 : i32
    %2 = arith.cmpi ne, %1, %c0_i32_0 : i32
    scf.if %2 {
      %cst_40 = arith.constant 0.000000e+00 : f32
      %47 = vector.broadcast %cst_40 : f32 to vector<32x128xf32>
      %c0_41 = arith.constant 0 : index
      %c0_42 = arith.constant 0 : index
      %48 = vector.load %arg6[%c0_41, %c0_42] : memref<32x128xf32, #tpu.memory_space<vmem>>, vector<32x128xf32>
      tpu.vector_store %arg6[%c0_41, %c0_42], %47 {strides = array<i32>} : memref<32x128xf32, #tpu.memory_space<vmem>>, vector<32x128xf32>,
      %cst_43 = arith.constant 0.000000e+00 : f32
      %49 = vector.broadcast %cst_43 : f32 to vector<16x128xf32>
      %c0_44 = arith.constant 0 : index
      %c0_45 = arith.constant 0 : index
      %50 = vector.load %arg7[%c0_44, %c0_45] : memref<16x128xf32, #tpu.memory_space<vmem>>, vector<16x128xf32>
      tpu.vector_store %arg7[%c0_44, %c0_45], %49 {strides = array<i32>} : memref<16x128xf32, #tpu.memory_space<vmem>>, vector<16x128xf32>,
    } else {
    }
    %c0 = arith.constant 0 : index
    %c0_1 = arith.constant 0 : index
    %3 = vector.load %arg3[%c0, %c0_1] : memref<32x512xf32, #tpu.memory_space<vmem>>, vector<32x512xf32>
    %c0_2 = arith.constant 0 : index
    %c0_3 = arith.constant 0 : index
    %4 = vector.load %arg4[%c0_2, %c0_3] : memref<32x512xf32, #tpu.memory_space<vmem>>, vector<32x512xf32>
    %5 = arith.subf %3, %4 : vector<32x512xf32>
    %6 = arith.mulf %5, %5 : vector<32x512xf32>
    %c0_4 = arith.constant 0 : index
    %c0_5 = arith.constant 0 : index
    %7 = vector.load %arg2[%c0_4, %c0_5] : memref<16x32xf32, #tpu.memory_space<vmem>>, vector<16x32xf32>
    %8 = arith.truncf %7 : vector<16x32xf32> to vector<16x32xbf16>
    %9 = arith.truncf %5 : vector<32x512xf32> to vector<32x512xbf16>
    %cst = arith.constant dense<0.000000e+00> : vector<16x512xf32>
    %10 = tpu.matmul %8, %9, %cst {dimension_numbers = #tpu.dot_dimension_numbers<[1], [0], [0], [1], [0, 0, 1, 1], [], []>} : vector<16x32xbf16>, vector<32x512xbf16>, vector<16x512xf32> -> vector<16x512xf32>
    %11 = arith.mulf %10, %10 : vector<16x512xf32>
    %c0_6 = arith.constant 0 : index
    %c0_7 = arith.constant 0 : index
    %12 = vector.load %arg6[%c0_6, %c0_7] : memref<32x128xf32, #tpu.memory_space<vmem>>, vector<32x128xf32>
    %13 = vector.extract_strided_slice %6 {offsets = [0, 0], sizes = [32, 128], strides = [1, 1]} : vector<32x512xf32> to vector<32x128xf32>
    %14 = arith.addf %12, %13 : vector<32x128xf32>
    %c0_8 = arith.constant 0 : index
    %c0_9 = arith.constant 0 : index
    %15 = vector.load %arg6[%c0_8, %c0_9] : memref<32x128xf32, #tpu.memory_space<vmem>>, vector<32x128xf32>
    tpu.vector_store %arg6[%c0_8, %c0_9], %14 {strides = array<i32>} : memref<32x128xf32, #tpu.memory_space<vmem>>, vector<32x128xf32>,
    %c0_10 = arith.constant 0 : index
    %c0_11 = arith.constant 0 : index
    %16 = vector.load %arg7[%c0_10, %c0_11] : memref<16x128xf32, #tpu.memory_space<vmem>>, vector<16x128xf32>
    %17 = vector.extract_strided_slice %11 {offsets = [0, 0], sizes = [16, 128], strides = [1, 1]} : vector<16x512xf32> to vector<16x128xf32>
    %18 = arith.addf %16, %17 : vector<16x128xf32>
    %c0_12 = arith.constant 0 : index
    %c0_13 = arith.constant 0 : index
    %19 = vector.load %arg7[%c0_12, %c0_13] : memref<16x128xf32, #tpu.memory_space<vmem>>, vector<16x128xf32>
    tpu.vector_store %arg7[%c0_12, %c0_13], %18 {strides = array<i32>} : memref<16x128xf32, #tpu.memory_space<vmem>>, vector<16x128xf32>,
    %c0_14 = arith.constant 0 : index
    %c0_15 = arith.constant 0 : index
    %20 = vector.load %arg6[%c0_14, %c0_15] : memref<32x128xf32, #tpu.memory_space<vmem>>, vector<32x128xf32>
    %21 = vector.extract_strided_slice %6 {offsets = [0, 128], sizes = [32, 128], strides = [1, 1]} : vector<32x512xf32> to vector<32x128xf32>
    %22 = arith.addf %20, %21 : vector<32x128xf32>
    %c0_16 = arith.constant 0 : index
    %c0_17 = arith.constant 0 : index
    %23 = vector.load %arg6[%c0_16, %c0_17] : memref<32x128xf32, #tpu.memory_space<vmem>>, vector<32x128xf32>
    tpu.vector_store %arg6[%c0_16, %c0_17], %22 {strides = array<i32>} : memref<32x128xf32, #tpu.memory_space<vmem>>, vector<32x128xf32>,
    %c0_18 = arith.constant 0 : index
    %c0_19 = arith.constant 0 : index
    %24 = vector.load %arg7[%c0_18, %c0_19] : memref<16x128xf32, #tpu.memory_space<vmem>>, vector<16x128xf32>
    %25 = vector.extract_strided_slice %11 {offsets = [0, 128], sizes = [16, 128], strides = [1, 1]} : vector<16x512xf32> to vector<16x128xf32>
    %26 = arith.addf %24, %25 : vector<16x128xf32>
    %c0_20 = arith.constant 0 : index
    %c0_21 = arith.constant 0 : index
    %27 = vector.load %arg7[%c0_20, %c0_21] : memref<16x128xf32, #tpu.memory_space<vmem>>, vector<16x128xf32>
    tpu.vector_store %arg7[%c0_20, %c0_21], %26 {strides = array<i32>} : memref<16x128xf32, #tpu.memory_space<vmem>>, vector<16x128xf32>,
    %c0_22 = arith.constant 0 : index
    %c0_23 = arith.constant 0 : index
    %28 = vector.load %arg6[%c0_22, %c0_23] : memref<32x128xf32, #tpu.memory_space<vmem>>, vector<32x128xf32>
    %29 = vector.extract_strided_slice %6 {offsets = [0, 256], sizes = [32, 128], strides = [1, 1]} : vector<32x512xf32> to vector<32x128xf32>
    %30 = arith.addf %28, %29 : vector<32x128xf32>
    %c0_24 = arith.constant 0 : index
    %c0_25 = arith.constant 0 : index
    %31 = vector.load %arg6[%c0_24, %c0_25] : memref<32x128xf32, #tpu.memory_space<vmem>>, vector<32x128xf32>
    tpu.vector_store %arg6[%c0_24, %c0_25], %30 {strides = array<i32>} : memref<32x128xf32, #tpu.memory_space<vmem>>, vector<32x128xf32>,
    %c0_26 = arith.constant 0 : index
    %c0_27 = arith.constant 0 : index
    %32 = vector.load %arg7[%c0_26, %c0_27] : memref<16x128xf32, #tpu.memory_space<vmem>>, vector<16x128xf32>
    %33 = vector.extract_strided_slice %11 {offsets = [0, 256], sizes = [16, 128], strides = [1, 1]} : vector<16x512xf32> to vector<16x128xf32>
    %34 = arith.addf %32, %33 : vector<16x128xf32>
    %c0_28 = arith.constant 0 : index
    %c0_29 = arith.constant 0 : index
    %35 = vector.load %arg7[%c0_28, %c0_29] : memref<16x128xf32, #tpu.memory_space<vmem>>, vector<16x128xf32>
    tpu.vector_store %arg7[%c0_28, %c0_29], %34 {strides = array<i32>} : memref<16x128xf32, #tpu.memory_space<vmem>>, vector<16x128xf32>,
    %c0_30 = arith.constant 0 : index
    %c0_31 = arith.constant 0 : index
    %36 = vector.load %arg6[%c0_30, %c0_31] : memref<32x128xf32, #tpu.memory_space<vmem>>, vector<32x128xf32>
    %37 = vector.extract_strided_slice %6 {offsets = [0, 384], sizes = [32, 128], strides = [1, 1]} : vector<32x512xf32> to vector<32x128xf32>
    %38 = arith.addf %36, %37 : vector<32x128xf32>
    %c0_32 = arith.constant 0 : index
    %c0_33 = arith.constant 0 : index
    %39 = vector.load %arg6[%c0_32, %c0_33] : memref<32x128xf32, #tpu.memory_space<vmem>>, vector<32x128xf32>
    tpu.vector_store %arg6[%c0_32, %c0_33], %38 {strides = array<i32>} : memref<32x128xf32, #tpu.memory_space<vmem>>, vector<32x128xf32>,
    %c0_34 = arith.constant 0 : index
    %c0_35 = arith.constant 0 : index
    %40 = vector.load %arg7[%c0_34, %c0_35] : memref<16x128xf32, #tpu.memory_space<vmem>>, vector<16x128xf32>
    %41 = vector.extract_strided_slice %11 {offsets = [0, 384], sizes = [16, 128], strides = [1, 1]} : vector<16x512xf32> to vector<16x128xf32>
    %42 = arith.addf %40, %41 : vector<16x128xf32>
    %c0_36 = arith.constant 0 : index
    %c0_37 = arith.constant 0 : index
    %43 = vector.load %arg7[%c0_36, %c0_37] : memref<16x128xf32, #tpu.memory_space<vmem>>, vector<16x128xf32>
    tpu.vector_store %arg7[%c0_36, %c0_37], %42 {strides = array<i32>} : memref<16x128xf32, #tpu.memory_space<vmem>>, vector<16x128xf32>,
    %c0_i32_38 = arith.constant 0 : i32
    %44 = arith.cmpi eq, %arg1, %c0_i32_38 : i32
    %45 = arith.extui %44 : i1 to i32
    %c0_i32_39 = arith.constant 0 : i32
    %46 = arith.cmpi ne, %45, %c0_i32_39 : i32
    scf.if %46 {
      %c0_40 = arith.constant 0 : index
      %c0_41 = arith.constant 0 : index
      %47 = vector.load %arg6[%c0_40, %c0_41] : memref<32x128xf32, #tpu.memory_space<vmem>>, vector<32x128xf32>
      %48 = vector.shape_cast %47 : vector<32x128xf32> to vector<1x32x128xf32>
      %cst_42 = arith.constant dense<0.000000e+00> : vector<1xf32>
      %49 = vector.multi_reduction <add>, %48, %cst_42 [1, 2] : vector<1x32x128xf32> to vector<1xf32>
      %50 = vector.shape_cast %49 : vector<1xf32> to vector<1x1x1xf32>
      %51 = vector.extract %50[0, 0, 0] : f32 from vector<1x1x1xf32>
      %52 = vector.broadcast %51 : f32 to vector<1x1xf32>
      %c0_43 = arith.constant 0 : index
      %c0_44 = arith.constant 0 : index
      %53 = vector.load %arg7[%c0_43, %c0_44] : memref<16x128xf32, #tpu.memory_space<vmem>>, vector<16x128xf32>
      %54 = vector.shape_cast %53 : vector<16x128xf32> to vector<1x16x128xf32>
      %cst_45 = arith.constant dense<0.000000e+00> : vector<1xf32>
      %55 = vector.multi_reduction <add>, %54, %cst_45 [1, 2] : vector<1x16x128xf32> to vector<1xf32>
      %56 = vector.shape_cast %55 : vector<1xf32> to vector<1x1x1xf32>
      %57 = vector.extract %56[0, 0, 0] : f32 from vector<1x1x1xf32>
      %58 = vector.broadcast %57 : f32 to vector<1x1xf32>
      %cst_46 = arith.constant 6.10351563E-5 : f32
      %59 = vector.broadcast %cst_46 : f32 to vector<1x1xf32>
      %60 = arith.mulf %52, %59 : vector<1x1xf32>
      %cst_47 = arith.constant 1.22070314E-11 : f32
      %61 = vector.broadcast %cst_47 : f32 to vector<1x1xf32>
      %62 = arith.mulf %58, %61 : vector<1x1xf32>
      %63 = arith.addf %60, %62 : vector<1x1xf32>
      %c0_48 = arith.constant 0 : index
      %c0_49 = arith.constant 0 : index
      %c0_50 = arith.constant 0 : index
      %64 = vector.load %arg5[%c0_48, %c0_49, %c0_50] : memref<1x1x1xf32, #tpu.memory_space<vmem>>, vector<1x1x1xf32>
      %65 = vector.shape_cast %64 : vector<1x1x1xf32> to vector<1x1xf32>
      %66 = vector.shape_cast %63 : vector<1x1xf32> to vector<1x1x1xf32>
      tpu.vector_store %arg5[%c0_48, %c0_49, %c0_50], %66 {strides = array<i32>} : memref<1x1x1xf32, #tpu.memory_space<vmem>>, vector<1x1x1xf32>,
    } else {
    }
    return
  }
  func.func @transform_0(%arg0: i32, %arg1: i32) -> (i32, i32) {
    %c0_i32 = arith.constant 0 : i32
    %c0_i32_0 = arith.constant 0 : i32
    %c0_i32_1 = arith.constant 0 : i32
    return %c0_i32, %c0_i32_0 : i32, i32
  }
  func.func @transform_1(%arg0: i32, %arg1: i32) -> (i32, i32) {
    %c1_i32 = arith.constant 1 : i32
    %0 = arith.muli %arg0, %c1_i32 : i32
    %1 = arith.addi %0, %arg1 : i32
    %c0_i32 = arith.constant 0 : i32
    %c0_i32_0 = arith.constant 0 : i32
    return %c0_i32, %1 : i32, i32
  }
  func.func @transform_2(%arg0: i32, %arg1: i32) -> (i32, i32) {
    %c1_i32 = arith.constant 1 : i32
    %0 = arith.muli %arg0, %c1_i32 : i32
    %1 = arith.addi %0, %arg1 : i32
    %c0_i32 = arith.constant 0 : i32
    %c0_i32_0 = arith.constant 0 : i32
    return %c0_i32, %1 : i32, i32
  }
  func.func @transform_3(%arg0: i32, %arg1: i32) -> (i32, i32, i32) {
    %c0_i32 = arith.constant 0 : i32
    %c0_i32_0 = arith.constant 0 : i32
    %c0_i32_1 = arith.constant 0 : i32
    return %arg0, %c0_i32, %c0_i32_0 : i32, i32, i32
  }
}

</mosaic_0001>

<llo_original>
// kernel: tpu_custom_call.1
$region0: #{tpu_custom_call.1}
  #allocation0 [shape = 'u32[]', space=smem, size = 0x4, offset = 0x4, fixed_abs, tag = 'smem constant byte address 0x4 - core index']
  #allocation1 [shape = 'u32[72,128]{1,0:T(1,128)}', space=vmem, size = 0x9000, scoped, tag = 'internal scratch']
  #allocation2 [shape = 'f32[32,128]{1,0:T(8,128)}', space=vmem, size = 0x4000, scoped, tag = 'scratch operand']
  #allocation3 [shape = 'f32[16,128]{1,0:T(8,128)}', space=vmem, size = 0x2000, scoped, tag = 'scratch operand']
  %s0 = inlined_call_operand.hbm [shape: f32[16,32], index: 0, kind: input, shape index: {}]
  %s1 = inlined_call_operand.hbm [shape: f32[32,512], index: 1, kind: input, shape index: {}]
  %s2 = inlined_call_operand.hbm [shape: f32[32,512], index: 2, kind: input, shape index: {}]
  %s3 = inlined_call_operand.hbm [shape: f32[1,1,1], index: 3, kind: output, shape index: {}]
  %s4 = sld [smem:[#allocation0]]
  $region42: #{tpu_custom_call.1} parent=0
    _
  %s6 = ssub.s32 1, %s4
  %s7 = scalar_select 0, %s6, %s4
  $region1: #{tpu_custom_call.1} parent=0
    #allocation4 [shape = 'u8[8192]{0}', space=vmem, size = 0x2000, scoped, tag = 'input window, operand 0, single buffered']
    #allocation5 [shape = 's32[1]{0}', space=sflag, size = 0x4, scoped, tag = 'scoped memory for tpu_custom_call.1']
    #allocation6 [shape = 's32[1]{0}', space=sflag, size = 0x4, scoped, tag = 'scoped memory for tpu_custom_call.1']
    #allocation7 [shape = 'u8[65536]{0}', space=vmem, size = 0x10000, scoped, tag = 'input window, operand 1, single buffered']
    #allocation8 [shape = 's32[1]{0}', space=sflag, size = 0x4, scoped, tag = 'scoped memory for tpu_custom_call.1']
    #allocation9 [shape = 'u8[65536]{0}', space=vmem, size = 0x10000, scoped, tag = 'input window, operand 2, single buffered']
    #allocation10 [shape = 'u8[512]{0}', space=vmem, size = 0x400, scoped, tag = 'output window, operand 0, single buffered']
    %8 = vsyncpa [#allocation5], 0
    %9 = vsyncpa [#allocation8], 0
    %10 = vsyncpa [#allocation6], 0
    // Predicated region
    $region2: #{tpu_custom_call.1} parent=1 // pred_check
      _
    $region3: #{tpu_custom_call.1} parent=1 // pred_check_branch
      %12 = sbr.rel (0) target = $region5
    $region4: #{tpu_custom_call.1} parent=1 // pred_region
      %14 = vsyncadd [#allocation5], 0
      %s15 = sshll.u32 %s0, 4
      %s16 = int_to_ptr.hbm [resolvable:$true] %s15
      %s17 = sshll.u32 [#allocation4], 4
      %s18 = int_to_ptr.vmem [resolvable:$true] %s17
      %23 = dma.hbm_to_vmem [thread:$0]  %s16, 256, %s18, [#allocation5], 128, 128, 8
    $region5: #{tpu_custom_call.1} parent=1 // pred_fallthru
      _
    // Predicated region
    $region6: #{tpu_custom_call.1} parent=1 // pred_check
      _
    $region7: #{tpu_custom_call.1} parent=1 // pred_check_branch
      %25 = sbr.rel (0) target = $region9
    $region8: #{tpu_custom_call.1} parent=1 // pred_region
      %s26 = sadd.s32 0, 0
      %s27 = smul.u32 4, %s26
      %29 = vsyncadd [#allocation8], 0
      %s30 = smul.addr %s27, 8
      %s31 = scalar_lea.hbm %s1, %s30
      %s32 = sshll.u32 %s31, 4
      %s33 = int_to_ptr.hbm [resolvable:$true] %s32
      %s34 = sshll.u32 [#allocation7], 4
      %s35 = int_to_ptr.vmem [resolvable:$true] %s34
      %40 = dma.hbm_to_vmem [thread:$0]  %s33, 2048, %s35, [#allocation8], 512, 512, 32
    $region9: #{tpu_custom_call.1} parent=1 // pred_fallthru
      _
    // Predicated region
    $region10: #{tpu_custom_call.1} parent=1 // pred_check
      _
    $region11: #{tpu_custom_call.1} parent=1 // pred_check_branch
      %42 = sbr.rel (0) target = $region13
    $region12: #{tpu_custom_call.1} parent=1 // pred_region
      %s43 = sadd.s32 0, 0
      %s44 = smul.u32 4, %s43
      %46 = vsyncadd [#allocation8], 0
      %s47 = smul.addr %s44, 8
      %s48 = scalar_lea.hbm %s2, %s47
      %s49 = sshll.u32 %s48, 4
      %s50 = int_to_ptr.hbm [resolvable:$true] %s49
      %s51 = sshll.u32 [#allocation9], 4
      %s52 = int_to_ptr.vmem [resolvable:$true] %s51
      %57 = dma.hbm_to_vmem [thread:$0]  %s50, 2048, %s52, [#allocation8], 512, 512, 32
    $region13: #{tpu_custom_call.1} parent=1 // pred_fallthru
      _
    // Predicated region
    $region14: #{tpu_custom_call.1} parent=1 // pred_check
      _
    $region15: #{tpu_custom_call.1} parent=1 // pred_check_branch
      %59 = sbr.rel (0) target = $region17
    $region16: #{tpu_custom_call.1} parent=1 // pred_region
      %61 = dma.done [#allocation5], 256
    $region17: #{tpu_custom_call.1} parent=1 // pred_fallthru
      _
    // Predicated region
    $region18: #{tpu_custom_call.1} parent=1 // pred_check
      _
    $region19: #{tpu_custom_call.1} parent=1 // pred_check_branch
      %63 = sbr.rel (0) target = $region21
    $region20: #{tpu_custom_call.1} parent=1 // pred_region
      %65 = dma.done [#allocation8], 2048
    $region21: #{tpu_custom_call.1} parent=1 // pred_fallthru
      _
    // Predicated region
    $region22: #{tpu_custom_call.1} parent=1 // pred_check
      _
    $region23: #{tpu_custom_call.1} parent=1 // pred_check_branch
      %67 = sbr.rel (0) target = $region25
    $region24: #{tpu_custom_call.1} parent=1 // pred_region
      %69 = dma.done [#allocation8], 2048
    $region25: #{tpu_custom_call.1} parent=1 // pred_fallthru
      _
    %s70 = sadd.s32 0, 0
    %s71 = smul.u32 4, %s70
    %s72 = sadd.s32 0, 0
    %s73 = smul.u32 4, %s72
    %p75 = scmp.eq.s32.totalorder 0, 0
    // Predicated region
    $region26: #{tpu_custom_call.1} parent=1 // pred_check
      %p76 = pneg %p75
    $region27: #{tpu_custom_call.1} parent=1 // pred_check_branch
      %78 = sbr.rel (%p76) target = $region29
    $region28: #{tpu_custom_call.1} parent=1 // pred_region
      %79 = vst [vmem:[#allocation2] sm:$0xff] 0.0
      %80 = vst [vmem:[#allocation2 + $0x8] sm:$0xff] 0.0
      %81 = vst [vmem:[#allocation2 + $0x10] sm:$0xff] 0.0
      %82 = vst [vmem:[#allocation2 + $0x18] sm:$0xff] 0.0
      %83 = vst [vmem:[#allocation3] sm:$0xff] 0.0
      %84 = vst [vmem:[#allocation3 + $0x8] sm:$0xff] 0.0
    $region29: #{tpu_custom_call.1} parent=1 // pred_fallthru
      _
    %v85 = vld [vmem:[#allocation7] sm:$0xff]
    %v86 = vld [vmem:[#allocation7 + $0x8] sm:$0xff]
    %v87 = vld [vmem:[#allocation7 + $0x10] sm:$0xff]
    %v88 = vld [vmem:[#allocation7 + $0x18] sm:$0xff]
    %v89 = vld [vmem:[#allocation7 + $0x20] sm:$0xff]
    %v90 = vld [vmem:[#allocation7 + $0x28] sm:$0xff]
    %v91 = vld [vmem:[#allocation7 + $0x30] sm:$0xff]
    %v92 = vld [vmem:[#allocation7 + $0x38] sm:$0xff]
    %v93 = vld [vmem:[#allocation7 + $0x40] sm:$0xff]
    %v94 = vld [vmem:[#allocation7 + $0x48] sm:$0xff]
    %v95 = vld [vmem:[#allocation7 + $0x50] sm:$0xff]
    %v96 = vld [vmem:[#allocation7 + $0x58] sm:$0xff]
    %v97 = vld [vmem:[#allocation7 + $0x60] sm:$0xff]
    %v98 = vld [vmem:[#allocation7 + $0x68] sm:$0xff]
    %v99 = vld [vmem:[#allocation7 + $0x70] sm:$0xff]
    %v100 = vld [vmem:[#allocation7 + $0x78] sm:$0xff]
    %v101 = vld [vmem:[#allocation9] sm:$0xff]
    %v102 = vld [vmem:[#allocation9 + $0x8] sm:$0xff]
    %v103 = vld [vmem:[#allocation9 + $0x10] sm:$0xff]
    %v104 = vld [vmem:[#allocation9 + $0x18] sm:$0xff]
    %v105 = vld [vmem:[#allocation9 + $0x20] sm:$0xff]
    %v106 = vld [vmem:[#allocation9 + $0x28] sm:$0xff]
    %v107 = vld [vmem:[#allocation9 + $0x30] sm:$0xff]
    %v108 = vld [vmem:[#allocation9 + $0x38] sm:$0xff]
    %v109 = vld [vmem:[#allocation9 + $0x40] sm:$0xff]
    %v110 = vld [vmem:[#allocation9 + $0x48] sm:$0xff]
    %v111 = vld [vmem:[#allocation9 + $0x50] sm:$0xff]
    %v112 = vld [vmem:[#allocation9 + $0x58] sm:$0xff]
    %v113 = vld [vmem:[#allocation9 + $0x60] sm:$0xff]
    %v114 = vld [vmem:[#allocation9 + $0x68] sm:$0xff]
    %v115 = vld [vmem:[#allocation9 + $0x70] sm:$0xff]
    %v116 = vld [vmem:[#allocation9 + $0x78] sm:$0xff]
    %v117 = vsub.f32 %v85, %v101
    %v118 = vsub.f32 %v86, %v102
    %v119 = vsub.f32 %v87, %v103
    %v120 = vsub.f32 %v88, %v104
    %v121 = vsub.f32 %v89, %v105
    %v122 = vsub.f32 %v90, %v106
    %v123 = vsub.f32 %v91, %v107
    %v124 = vsub.f32 %v92, %v108
    %v125 = vsub.f32 %v93, %v109
    %v126 = vsub.f32 %v94, %v110
    %v127 = vsub.f32 %v95, %v111
    %v128 = vsub.f32 %v96, %v112
    %v129 = vsub.f32 %v97, %v113
    %v130 = vsub.f32 %v98, %v114
    %v131 = vsub.f32 %v99, %v115
    %v132 = vsub.f32 %v100, %v116
    %v133 = vmul.f32 %v117, %v117
    %v134 = vmul.f32 %v118, %v118
    %v135 = vmul.f32 %v119, %v119
    %v136 = vmul.f32 %v120, %v120
    %v137 = vmul.f32 %v121, %v121
    %v138 = vmul.f32 %v122, %v122
    %v139 = vmul.f32 %v123, %v123
    %v140 = vmul.f32 %v124, %v124
    %v141 = vmul.f32 %v125, %v125
    %v142 = vmul.f32 %v126, %v126
    %v143 = vmul.f32 %v127, %v127
    %v144 = vmul.f32 %v128, %v128
    %v145 = vmul.f32 %v129, %v129
    %v146 = vmul.f32 %v130, %v130
    %v147 = vmul.f32 %v131, %v131
    %v148 = vmul.f32 %v132, %v132
    %v149 = vld [vmem:[#allocation4] sm:$0xff]
    %v150 = vld [vmem:[#allocation4 + $0x8] sm:$0xff]
    %v151 = vpack.c.bf16 %v150, %v149
    %v152 = vpack.c.bf16 %v121, %v117
    %v153 = vpack.c.bf16 %v122, %v118
    %v154 = vpack.c.bf16 %v123, %v119
    %v155 = vpack.c.bf16 %v124, %v120
    %v156 = vpack.c.bf16 %v129, %v125
    %v157 = vpack.c.bf16 %v130, %v126
    %v158 = vpack.c.bf16 %v131, %v127
    %v159 = vpack.c.bf16 %v132, %v128
    %vm160 = vcmask 261120
    %v162 = vsel %vm160, %v151, 0
    %164 = vmatpush.bf16.msra.mxu0 0
    %165 = vmatpush.bf16.msra.mxu0 0
    %166 = vmatpush.bf16.msra.mxu0 0
    %167 = vmatpush.bf16.msra.mxu0 0
    %168 = vmatpush.bf16.msra.mxu0 0
    %169 = vmatpush.bf16.msra.mxu0 0
    %170 = vmatpush.bf16.msra.mxu0 %v156
    %171 = vmatpush.bf16.msra.mxu0 %v152
    %172 = vmatmul.bf16.gmra.mxu0 %v162
    %v173 = vpop.f32.mrf.mxu0
    %v174 = vadd.f32 0.0, %v173
    %v175 = vpop.f32.mrf.mxu0
    %v176 = vadd.f32 0.0, %v175
    %177 = vdwg.mxu0
    %178 = vmatpush.bf16.msra.mxu0 0
    %179 = vmatpush.bf16.msra.mxu0 0
    %180 = vmatpush.bf16.msra.mxu0 0
    %181 = vmatpush.bf16.msra.mxu0 0
    %182 = vmatpush.bf16.msra.mxu0 0
    %183 = vmatpush.bf16.msra.mxu0 0
    %184 = vmatpush.bf16.msra.mxu0 %v157
    %185 = vmatpush.bf16.msra.mxu0 %v153
    %186 = vmatmul.bf16.gmra.mxu0 %v162
    %v187 = vpop.f32.mrf.mxu0
    %v188 = vadd.f32 0.0, %v187
    %v189 = vpop.f32.mrf.mxu0
    %v190 = vadd.f32 0.0, %v189
    %191 = vdwg.mxu0
    %192 = vmatpush.bf16.msra.mxu0 0
    %193 = vmatpush.bf16.msra.mxu0 0
    %194 = vmatpush.bf16.msra.mxu0 0
    %195 = vmatpush.bf16.msra.mxu0 0
    %196 = vmatpush.bf16.msra.mxu0 0
    %197 = vmatpush.bf16.msra.mxu0 0
    %198 = vmatpush.bf16.msra.mxu0 %v158
    %199 = vmatpush.bf16.msra.mxu0 %v154
    %200 = vmatmul.bf16.gmra.mxu0 %v162
    %v201 = vpop.f32.mrf.mxu0
    %v202 = vadd.f32 0.0, %v201
    %v203 = vpop.f32.mrf.mxu0
    %v204 = vadd.f32 0.0, %v203
    %205 = vdwg.mxu0
    %206 = vmatpush.bf16.msra.mxu0 0
    %207 = vmatpush.bf16.msra.mxu0 0
    %208 = vmatpush.bf16.msra.mxu0 0
    %209 = vmatpush.bf16.msra.mxu0 0
    %210 = vmatpush.bf16.msra.mxu0 0
    %211 = vmatpush.bf16.msra.mxu0 0
    %212 = vmatpush.bf16.msra.mxu0 %v159
    %213 = vmatpush.bf16.msra.mxu0 %v155
    %214 = vmatmul.bf16.gmra.mxu0 %v162
    %v215 = vpop.f32.mrf.mxu0
    %v216 = vadd.f32 0.0, %v215
    %v217 = vpop.f32.mrf.mxu0
    %v218 = vadd.f32 0.0, %v217
    %219 = vdwg.mxu0
    %v220 = vmul.f32 %v174, %v174
    %v221 = vmul.f32 %v188, %v188
    %v222 = vmul.f32 %v202, %v202
    %v223 = vmul.f32 %v216, %v216
    %v224 = vmul.f32 %v176, %v176
    %v225 = vmul.f32 %v190, %v190
    %v226 = vmul.f32 %v204, %v204
    %v227 = vmul.f32 %v218, %v218
    %v228 = vld [vmem:[#allocation2] sm:$0xff]
    %v229 = vld [vmem:[#allocation2 + $0x8] sm:$0xff]
    %v230 = vld [vmem:[#allocation2 + $0x10] sm:$0xff]
    %v231 = vld [vmem:[#allocation2 + $0x18] sm:$0xff]
    %v232 = vadd.f32 %v228, %v133
    %v233 = vadd.f32 %v229, %v137
    %v234 = vadd.f32 %v230, %v141
    %v235 = vadd.f32 %v231, %v145
    %236 = vst [vmem:[#allocation2] sm:$0xff] %v232
    %237 = vst [vmem:[#allocation2 + $0x8] sm:$0xff] %v233
    %238 = vst [vmem:[#allocation2 + $0x10] sm:$0xff] %v234
    %239 = vst [vmem:[#allocation2 + $0x18] sm:$0xff] %v235
    %v240 = vld [vmem:[#allocation3] sm:$0xff]
    %v241 = vld [vmem:[#allocation3 + $0x8] sm:$0xff]
    %v242 = vadd.f32 %v240, %v220
    %v243 = vadd.f32 %v241, %v224
    %244 = vst [vmem:[#allocation3] sm:$0xff] %v242
    %245 = vst [vmem:[#allocation3 + $0x8] sm:$0xff] %v243
    %v246 = vld [vmem:[#allocation2] sm:$0xff]
    %v247 = vld [vmem:[#allocation2 + $0x8] sm:$0xff]
    %v248 = vld [vmem:[#allocation2 + $0x10] sm:$0xff]
    %v249 = vld [vmem:[#allocation2 + $0x18] sm:$0xff]
    %v250 = vadd.f32 %v246, %v134
    %v251 = vadd.f32 %v247, %v138
    %v252 = vadd.f32 %v248, %v142
    %v253 = vadd.f32 %v249, %v146
    %254 = vst [vmem:[#allocation2] sm:$0xff] %v250
    %255 = vst [vmem:[#allocation2 + $0x8] sm:$0xff] %v251
    %256 = vst [vmem:[#allocation2 + $0x10] sm:$0xff] %v252
    %257 = vst [vmem:[#allocation2 + $0x18] sm:$0xff] %v253
    %v258 = vld [vmem:[#allocation3] sm:$0xff]
    %v259 = vld [vmem:[#allocation3 + $0x8] sm:$0xff]
    %v260 = vadd.f32 %v258, %v221
    %v261 = vadd.f32 %v259, %v225
    %262 = vst [vmem:[#allocation3] sm:$0xff] %v260
    %263 = vst [vmem:[#allocation3 + $0x8] sm:$0xff] %v261
    %v264 = vld [vmem:[#allocation2] sm:$0xff]
    %v265 = vld [vmem:[#allocation2 + $0x8] sm:$0xff]
    %v266 = vld [vmem:[#allocation2 + $0x10] sm:$0xff]
    %v267 = vld [vmem:[#allocation2 + $0x18] sm:$0xff]
    %v268 = vadd.f32 %v264, %v135
    %v269 = vadd.f32 %v265, %v139
    %v270 = vadd.f32 %v266, %v143
    %v271 = vadd.f32 %v267, %v147
    %272 = vst [vmem:[#allocation2] sm:$0xff] %v268
    %273 = vst [vmem:[#allocation2 + $0x8] sm:$0xff] %v269
    %274 = vst [vmem:[#allocation2 + $0x10] sm:$0xff] %v270
    %275 = vst [vmem:[#allocation2 + $0x18] sm:$0xff] %v271
    %v276 = vld [vmem:[#allocation3] sm:$0xff]
    %v277 = vld [vmem:[#allocation3 + $0x8] sm:$0xff]
    %v278 = vadd.f32 %v276, %v222
    %v279 = vadd.f32 %v277, %v226
    %280 = vst [vmem:[#allocation3] sm:$0xff] %v278
    %281 = vst [vmem:[#allocation3 + $0x8] sm:$0xff] %v279
    %v282 = vld [vmem:[#allocation2] sm:$0xff]
    %v283 = vld [vmem:[#allocation2 + $0x8] sm:$0xff]
    %v284 = vld [vmem:[#allocation2 + $0x10] sm:$0xff]
    %v285 = vld [vmem:[#allocation2 + $0x18] sm:$0xff]
    %v286 = vadd.f32 %v282, %v136
    %v287 = vadd.f32 %v283, %v140
    %v288 = vadd.f32 %v284, %v144
    %v289 = vadd.f32 %v285, %v148
    %290 = vst [vmem:[#allocation2] sm:$0xff] %v286
    %291 = vst [vmem:[#allocation2 + $0x8] sm:$0xff] %v287
    %292 = vst [vmem:[#allocation2 + $0x10] sm:$0xff] %v288
    %293 = vst [vmem:[#allocation2 + $0x18] sm:$0xff] %v289
    %v294 = vld [vmem:[#allocation3] sm:$0xff]
    %v295 = vld [vmem:[#allocation3 + $0x8] sm:$0xff]
    %v296 = vadd.f32 %v294, %v223
    %v297 = vadd.f32 %v295, %v227
    %298 = vst [vmem:[#allocation3] sm:$0xff] %v296
    %299 = vst [vmem:[#allocation3 + $0x8] sm:$0xff] %v297
    // Predicated region
    $region30: #{tpu_custom_call.1} parent=1 // pred_check
      %p300 = pneg %p75
    $region31: #{tpu_custom_call.1} parent=1 // pred_check_branch
      %302 = sbr.rel (%p300) target = $region33
    $region32: #{tpu_custom_call.1} parent=1 // pred_region
      %v303 = vld [vmem:[#allocation2] sm:$0xff]
      %v304 = vld [vmem:[#allocation2 + $0x8] sm:$0xff]
      %v305 = vld [vmem:[#allocation2 + $0x10] sm:$0xff]
      %v306 = vld [vmem:[#allocation2 + $0x18] sm:$0xff]
      %v307 = vadd.f32 %v303, %v304
      %v308 = vadd.f32 %v307, %v305
      %v309 = vadd.f32 %v308, %v306
      %310 = vadd.xlane.f32.xlu0 %v309
      %v311 = vpop.xlane.xlu0 %310
      %v312 = vrot.slane %v311, 4
      %v313 = vadd.f32 %v311, %v312
      %v314 = vrot.slane %v313, 2
      %v315 = vadd.f32 %v313, %v314
      %v316 = vrot.slane %v315, 1
      %v317 = vadd.f32 %v315, %v316
      %s318 = vtos %v317
      %v319 = vstv %s318
      %v320 = vld [vmem:[#allocation3] sm:$0xff]
      %v321 = vld [vmem:[#allocation3 + $0x8] sm:$0xff]
      %v322 = vadd.f32 %v320, %v321
      %323 = vadd.xlane.f32.xlu0 %v322
      %v324 = vpop.xlane.xlu0 %323
      %v325 = vrot.slane %v324, 4
      %v326 = vadd.f32 %v324, %v325
      %v327 = vrot.slane %v326, 2
      %v328 = vadd.f32 %v326, %v327
      %v329 = vrot.slane %v328, 1
      %v330 = vadd.f32 %v328, %v329
      %s331 = vtos %v330
      %v332 = vstv %s331
      %v333 = vmul.f32 %v319, 6.1035156e-05
      %v334 = vmul.f32 %v332, 1.2207031e-11
      %v335 = vadd.f32 %v333, %v334
      %vm336 = vcmask 0
      %337 = vst.msk [vmem:[#allocation10] sm:$0x1] %vm336, %v335
    $region33: #{tpu_custom_call.1} parent=1 // pred_fallthru
      _
    // Predicated region
    $region34: #{tpu_custom_call.1} parent=1 // pred_check
      _
    $region35: #{tpu_custom_call.1} parent=1 // pred_check_branch
      %339 = sbr.rel (0) target = $region37
    $region36: #{tpu_custom_call.1} parent=1 // pred_region
      %341 = vsyncadd [#allocation6], 0
      %s343 = sshll.u32 [#allocation10], 4
      %s344 = int_to_ptr.vmem [resolvable:$true] %s343
      %s345 = sshll.u32 %s3, 4
      %s346 = int_to_ptr.hbm [resolvable:$true] %s345
      %348 = dma.vmem_to_hbm [thread:$0]  %s344, 16, %s346, [#allocation6]
    $region37: #{tpu_custom_call.1} parent=1 // pred_fallthru
      _
    // Predicated region
    $region38: #{tpu_custom_call.1} parent=1 // pred_check
      _
    $region39: #{tpu_custom_call.1} parent=1 // pred_check_branch
      %350 = sbr.rel (0) target = $region41
    $region40: #{tpu_custom_call.1} parent=1 // pred_region
      %352 = dma.done [#allocation6], 16
    $region41: #{tpu_custom_call.1} parent=1 // pred_fallthru
      _
    %353 = vsyncpa [#allocation5], 1
    %354 = vsyncpa [#allocation8], 1
    %355 = vsyncpa [#allocation6], 1

</llo_original>
